<compile_context>
chip_gen: v7x
topology: tpu7x:2x2x1
jax: 0.10.0
libtpu: 0.0.40
codegen_flags: <defaults>
</compile_context>

<pallas_src>
import functools

import jax
import jax.numpy as jnp
from jax import lax
from jax.experimental import pallas as pl
from jax.experimental.pallas import tpu as pltpu

_EPS = 1e-5


def _round_up(a: int, b: int) -> int:
    return (a + b - 1) // b * b


def _sublane_multiple(dtype) -> int:
    itemsize = jnp.dtype(dtype).itemsize
    return {4: 8, 2: 16, 1: 32}.get(itemsize, 8)


def _hw_params():
    """(target_input_block_bytes, vmem_limit_bytes) per TPU generation."""
    try:
        kind = jax.devices()[0].device_kind.lower()
    except Exception:
        kind = ""
    if "v7" in kind:
        # 3.2 TB/s HBM, 64 MiB VMEM/TC: bigger blocks to amortize ~0.35us/step,
        # but leave headroom under the 64 MiB physical limit.
        return 6 * 1024 * 1024, 48 * 1024 * 1024
    if "v6" in kind:
        # 128 MiB physical VMEM: 4 MiB blocks sit on the measured tiling plateau.
        return 4 * 1024 * 1024, 64 * 1024 * 1024
    # v5e / unknown: 2 MiB is already ~93% of the 0.82 TB/s roofline.
    return 2 * 1024 * 1024, 32 * 1024 * 1024


def _choose_tile_rows(rows, lane_dim, itemsize, sub, target_bytes, vmem_limit):
    """Pick the row-tile size for a (rows, lane_dim) array."""
    if rows <= sub:
        # Single full-extent block (always a legal block shape).
        return max(rows, 1)
    bytes_per_row_in = lane_dim * itemsize
    tr = max(sub, (target_bytes // bytes_per_row_in) // sub * sub)
    # Per-step VMEM estimate: double-buffered in + out, plus ~3 f32 temporaries.
    per_row_vmem = lane_dim * (4 * itemsize + 12)
    budget = int(vmem_limit * 0.85)
    cap = max(sub, (budget // per_row_vmem) // sub * sub)
    tr = min(tr, cap)
    tr = min(tr, _round_up(rows, sub))
    # Guarantee >= 2 grid steps when there is enough work: the "parallel" row
    # grid then shards across both TensorCores on v7x (harmless on 1-TC chips).
    if pl.cdiv(rows, tr) < 2:
        tr = max(sub, _round_up(pl.cdiv(rows, 2), sub))
    return tr


def _layernorm_kernel(x_ref, w_ref, o_ref, *, inv_n):
    # Standard path: x_ref (tr, ndim), w_ref (1, ndim) f32, o_ref (tr, ndim).
    x = x_ref[...].astype(jnp.float32)
    mean = jnp.sum(x, axis=-1, keepdims=True) * inv_n
    xc = x - mean
    # torch.var (unbiased) * (n-1)/n == biased variance == mean of squared deviations.
    var = jnp.sum(xc * xc, axis=-1, keepdims=True) * inv_n
    o_ref[...] = (xc * lax.rsqrt(var + _EPS) * w_ref[...]).astype(o_ref.dtype)


def _layernorm_packed_kernel(x_ref, m_ref, w_ref, o_ref, *, inv_n):
    # Lane-dense path for ndim < 128: each physical 128-lane row packs
    # pack = 128 // ndim logical rows.  Segmented sums are computed with a
    # block-diagonal ones matmul (ones are exact in bf16), using a 2-pass
    # hi/lo bf16 split for near-f32 accuracy at ~1/3 the MXU passes of HIGHEST.
    x = x_ref[...].astype(jnp.float32)
    m = m_ref[...]  # bf16 block-diagonal ones matrix

    def seg_sum(v):
        hi = v.astype(jnp.bfloat16)
        lo = (v - hi.astype(jnp.float32)).astype(jnp.bfloat16)
        return (jnp.dot(hi, m, preferred_element_type=jnp.float32)
                + jnp.dot(lo, m, preferred_element_type=jnp.float32))

    mean = seg_sum(x) * inv_n
    xc = x - mean
    var = seg_sum(xc * xc) * inv_n
    o_ref[...] = (xc * lax.rsqrt(var + _EPS) * w_ref[...]).astype(o_ref.dtype)


def layernorm_pallas(x, weight):
    """LayerNorm (no bias) over the last dim, eps=1e-5, matching LayerNormImpl."""
    orig_shape = x.shape
    ndim = orig_shape[-1]
    assert weight.shape == (ndim,)
    x2 = x.reshape(-1, ndim)
    R = x2.shape[0]
    itemsize = jnp.dtype(x.dtype).itemsize
    sub = _sublane_multiple(x.dtype)
    target_bytes, vmem_limit = _hw_params()

    compiler_params = pltpu.CompilerParams(
        dimension_semantics=("parallel",),
        vmem_limit_bytes=vmem_limit,
    )

    if ndim < 128 and 128 % ndim == 0:
        # ---------------- lane-dense packed path (small hidden sizes) ----------------
        pack = 128 // ndim
        rem = R % pack
        if rem:
            # Pad only up to pack-1 rows so the reshape to (*, 128) is contiguous;
            # pad rows are independent under LayerNorm and sliced off below.
            x2 = jnp.pad(x2, ((0, pack - rem), (0, 0)))
        packed_rows = x2.shape[0] // pack
        xp = x2.reshape(packed_rows, 128)

        # Block-diagonal ones matrix: M[i, j] = 1 iff lanes i, j share a segment.
        seg = jnp.arange(128, dtype=jnp.int32) // ndim
        m = (seg[:, None] == seg[None, :]).astype(jnp.bfloat16)
        w_tiled = jnp.tile(weight.astype(jnp.float32), pack).reshape(1, 128)

        tr = _choose_tile_rows(packed_rows, 128, itemsize, sub, target_bytes, vmem_limit)
        kernel = functools.partial(_layernorm_packed_kernel, inv_n=float(1.0 / ndim))
        out = pl.pallas_call(
            kernel,
            out_shape=jax.ShapeDtypeStruct((packed_rows, 128), x.dtype),
            grid_spec=pltpu.PrefetchScalarGridSpec(
                num_scalar_prefetch=0,
                grid=(pl.cdiv(packed_rows, tr),),
                in_specs=[
                    pl.BlockSpec((tr, 128), lambda i: (i, 0)),
                    pl.BlockSpec((128, 128), lambda i: (0, 0)),
                    pl.BlockSpec((1, 128), lambda i: (0, 0)),
                ],
                out_specs=pl.BlockSpec((tr, 128), lambda i: (i, 0)),
            ),
            compiler_params=compiler_params,
        )(xp, m, w_tiled)
        out = out.reshape(packed_rows * pack, ndim)
        if rem:
            out = out[:R]
        return out.reshape(orig_shape)

    # ---------------- standard path (ndim >= 128, or awkward small ndim) ----------------
    # Ragged row counts handled by the grid: the last block's OOB rows are
    # computed on unspecified data (rows are independent) and their stores dropped.
    # TODO(synk): lane-padded variant for ndim not a multiple of 128 to avoid masked
    # partial stores (only matters for odd hidden sizes).
    w2 = weight.astype(jnp.float32).reshape(1, ndim)
    tr = _choose_tile_rows(R, ndim, itemsize, sub, target_bytes, vmem_limit)
    kernel = functools.partial(_layernorm_kernel, inv_n=float(1.0 / ndim))
    out = pl.pallas_call(
        kernel,
        out_shape=jax.ShapeDtypeStruct((R, ndim), x.dtype),
        grid_spec=pltpu.PrefetchScalarGridSpec(
            num_scalar_prefetch=0,
            grid=(pl.cdiv(R, tr),),
            in_specs=[
                pl.BlockSpec((tr, ndim), lambda i: (i, 0)),
                pl.BlockSpec((1, ndim), lambda i: (0, 0)),
            ],
            out_specs=pl.BlockSpec((tr, ndim), lambda i: (i, 0)),
        ),
        compiler_params=compiler_params,
    )(x2, w2)
    return out.reshape(orig_shape)


if __name__ == "__main__":
    key = jax.random.PRNGKey(0)
    k1, k2, k3 = jax.random.split(key, 3)

    def ref_ln(x, w):
        mean = jnp.mean(x, axis=-1, keepdims=True)
        var = jnp.mean((x - mean) ** 2, axis=-1, keepdims=True)
        return (x - mean) / jnp.sqrt(var + _EPS) * w

    # Packed lane-dense path (hidden=32 < 128); rows divisible by pack.
    batch, seq, hidden = 2, 8, 32
    x = jax.random.normal(k1, (batch, seq, hidden), dtype=jnp.float32)
    weight = jnp.ones((hidden,), dtype=jnp.float32)  # module init: ones(ndim)
    y = layernorm_pallas(x, weight)
    jax.block_until_ready(y)
    ref = ref_ln(x, weight)
    assert jnp.allclose(y, ref, atol=1e-4, rtol=1e-4), float(jnp.max(jnp.abs(y - ref)))

    # Packed path with ragged row count (R % pack != 0).
    xr = jax.random.normal(k2, (1, 5, hidden), dtype=jnp.float32)
    yr = layernorm_pallas(xr, weight)
    jax.block_until_ready(yr)
    refr = ref_ln(xr, weight)
    assert jnp.allclose(yr, refr, atol=1e-4, rtol=1e-4), float(jnp.max(jnp.abs(yr - refr)))

    # Standard path (hidden=128) with a ragged last row block (>= 2 grid steps).
    hidden2 = 128
    x2 = jax.random.normal(k3, (2, 9, hidden2), dtype=jnp.float32)
    w2 = jnp.ones((hidden2,), dtype=jnp.float32)
    y2 = layernorm_pallas(x2, w2)
    jax.block_until_ready(y2)
    ref2 = ref_ln(x2, w2)
    assert jnp.allclose(y2, ref2, atol=1e-4, rtol=1e-4), float(jnp.max(jnp.abs(y2 - ref2)))

    print("KERNEL_OK")
</pallas_src>

<mosaic_0001>
module attributes {stable_mosaic.version = 11 : i64} {
  func.func @_layernorm_packed_kernel(%arg0: i32, %arg1: memref<4x128xf32, #tpu.memory_space<vmem>>, %arg2: memref<128x128xbf16, #tpu.memory_space<vmem>>, %arg3: memref<1x128xf32, #tpu.memory_space<vmem>>, %arg4: memref<4x128xf32, #tpu.memory_space<vmem>>) attributes {dimension_semantics = [#tpu.dimension_semantics<parallel>], iteration_bounds = array<i64: 1>, scalar_prefetch = 0 : i64, scratch_operands = 0 : i64, tpu.core_type = #tpu.core_type<tc>, window_params = [{transform_indices = @transform_0, window_bounds = array<i64: 4, 128>}, {pipeline_mode = #tpu.pipeline_mode<synchronous>, transform_indices = @transform_1, window_bounds = array<i64: 128, 128>}, {pipeline_mode = #tpu.pipeline_mode<synchronous>, transform_indices = @transform_2, window_bounds = array<i64: 1, 128>}, {transform_indices = @transform_3, window_bounds = array<i64: 4, 128>}]} {
    %c0 = arith.constant 0 : index
    %c0_0 = arith.constant 0 : index
    %0 = vector.load %arg1[%c0, %c0_0] : memref<4x128xf32, #tpu.memory_space<vmem>>, vector<4x128xf32>
    %c0_1 = arith.constant 0 : index
    %c0_2 = arith.constant 0 : index
    %1 = vector.load %arg2[%c0_1, %c0_2] : memref<128x128xbf16, #tpu.memory_space<vmem>>, vector<128x128xbf16>
    %2 = arith.truncf %0 : vector<4x128xf32> to vector<4x128xbf16>
    %3 = arith.extf %2 : vector<4x128xbf16> to vector<4x128xf32>
    %4 = arith.subf %0, %3 : vector<4x128xf32>
    %5 = arith.truncf %4 : vector<4x128xf32> to vector<4x128xbf16>
    %cst = arith.constant dense<0.000000e+00> : vector<4x128xf32>
    %6 = tpu.matmul %2, %1, %cst {dimension_numbers = #tpu.dot_dimension_numbers<[1], [0], [0], [1], [0, 0, 1, 1], [], []>} : vector<4x128xbf16>, vector<128x128xbf16>, vector<4x128xf32> -> vector<4x128xf32>
    %cst_3 = arith.constant dense<0.000000e+00> : vector<4x128xf32>
    %7 = tpu.matmul %5, %1, %cst_3 {dimension_numbers = #tpu.dot_dimension_numbers<[1], [0], [0], [1], [0, 0, 1, 1], [], []>} : vector<4x128xbf16>, vector<128x128xbf16>, vector<4x128xf32> -> vector<4x128xf32>
    %8 = arith.addf %6, %7 : vector<4x128xf32>
    %cst_4 = arith.constant 3.125000e-02 : f32
    %9 = vector.broadcast %cst_4 : f32 to vector<4x128xf32>
    %10 = arith.mulf %8, %9 : vector<4x128xf32>
    %11 = arith.subf %0, %10 : vector<4x128xf32>
    %12 = arith.mulf %11, %11 : vector<4x128xf32>
    %13 = arith.truncf %12 : vector<4x128xf32> to vector<4x128xbf16>
    %14 = arith.extf %13 : vector<4x128xbf16> to vector<4x128xf32>
    %15 = arith.subf %12, %14 : vector<4x128xf32>
    %16 = arith.truncf %15 : vector<4x128xf32> to vector<4x128xbf16>
    %cst_5 = arith.constant dense<0.000000e+00> : vector<4x128xf32>
    %17 = tpu.matmul %13, %1, %cst_5 {dimension_numbers = #tpu.dot_dimension_numbers<[1], [0], [0], [1], [0, 0, 1, 1], [], []>} : vector<4x128xbf16>, vector<128x128xbf16>, vector<4x128xf32> -> vector<4x128xf32>
    %cst_6 = arith.constant dense<0.000000e+00> : vector<4x128xf32>
    %18 = tpu.matmul %16, %1, %cst_6 {dimension_numbers = #tpu.dot_dimension_numbers<[1], [0], [0], [1], [0, 0, 1, 1], [], []>} : vector<4x128xbf16>, vector<128x128xbf16>, vector<4x128xf32> -> vector<4x128xf32>
    %19 = arith.addf %17, %18 : vector<4x128xf32>
    %cst_7 = arith.constant 3.125000e-02 : f32
    %20 = vector.broadcast %cst_7 : f32 to vector<4x128xf32>
    %21 = arith.mulf %19, %20 : vector<4x128xf32>
    %cst_8 = arith.constant 9.99999974E-6 : f32
    %22 = vector.broadcast %cst_8 : f32 to vector<4x128xf32>
    %23 = arith.addf %21, %22 : vector<4x128xf32>
    %24 = math.rsqrt %23 : vector<4x128xf32>
    %25 = arith.mulf %11, %24 : vector<4x128xf32>
    %c0_9 = arith.constant 0 : index
    %c0_10 = arith.constant 0 : index
    %26 = vector.load %arg3[%c0_9, %c0_10] : memref<1x128xf32, #tpu.memory_space<vmem>>, vector<1x128xf32>
    %27 = vector.broadcast %26 : vector<1x128xf32> to vector<4x128xf32>
    %28 = arith.mulf %25, %27 : vector<4x128xf32>
    %c0_11 = arith.constant 0 : index
    %c0_12 = arith.constant 0 : index
    %29 = vector.load %arg4[%c0_11, %c0_12] : memref<4x128xf32, #tpu.memory_space<vmem>>, vector<4x128xf32>
    tpu.vector_store %arg4[%c0_11, %c0_12], %28 {strides = array<i32>} : memref<4x128xf32, #tpu.memory_space<vmem>>, vector<4x128xf32>,
    return
  }
  func.func @transform_0(%arg0: i32) -> (i32, i32) {
    %c0_i32 = arith.constant 0 : i32
    %c0_i32_0 = arith.constant 0 : i32
    return %arg0, %c0_i32 : i32, i32
  }
  func.func @transform_1(%arg0: i32) -> (i32, i32) {
    %c0_i32 = arith.constant 0 : i32
    %c0_i32_0 = arith.constant 0 : i32
    %c0_i32_1 = arith.constant 0 : i32
    return %c0_i32, %c0_i32_0 : i32, i32
  }
  func.func @transform_2(%arg0: i32) -> (i32, i32) {
    %c0_i32 = arith.constant 0 : i32
    %c0_i32_0 = arith.constant 0 : i32
    %c0_i32_1 = arith.constant 0 : i32
    return %c0_i32, %c0_i32_0 : i32, i32
  }
  func.func @transform_3(%arg0: i32) -> (i32, i32) {
    %c0_i32 = arith.constant 0 : i32
    %c0_i32_0 = arith.constant 0 : i32
    return %arg0, %c0_i32 : i32, i32
  }
}

</mosaic_0001>

<llo_original>
// kernel: tpu_custom_call.1
$region0: #{tpu_custom_call.1}
  #allocation0 [shape = 'u32[]', space=smem, size = 0x4, offset = 0x4, fixed_abs, tag = 'smem constant byte address 0x4 - core index']
  #allocation1 [shape = 'u32[144,128]{1,0:T(1,128)}', space=vmem, size = 0x12000, scoped, tag = 'internal scratch']
  %s0 = inlined_call_operand.hbm [shape: f32[4,128], index: 0, kind: input, shape index: {}]
  %s1 = inlined_call_operand.hbm [shape: bf16[128,128], index: 1, kind: input, shape index: {}]
  %s2 = inlined_call_operand.vmem [shape: f32[1,128], index: 2, kind: input, shape index: {}]
  %s3 = inlined_call_operand.hbm [shape: f32[4,128], index: 3, kind: output, shape index: {}]
  %s4 = sld [smem:[#allocation0]]
  $region30: #{tpu_custom_call.1} parent=0
    _
  %s6 = ssub.s32 1, %s4
  %s7 = scalar_select 0, %s6, %s4
  $region1: #{tpu_custom_call.1} parent=0
    #allocation2 [shape = 'u8[2048]{0}', space=vmem, size = 0x800, scoped, tag = 'input window, operand 0, single buffered']
    #allocation3 [shape = 's32[1]{0}', space=sflag, size = 0x4, scoped, tag = 'scoped memory for tpu_custom_call.1']
    #allocation4 [shape = 's32[1]{0}', space=sflag, size = 0x4, scoped, tag = 'scoped memory for tpu_custom_call.1']
    #allocation5 [shape = 'u8[32768]{0}', space=vmem, size = 0x8000, scoped, tag = 'input window, operand 1, single buffered']
    #allocation6 [shape = 's32[1]{0}', space=sflag, size = 0x4, scoped, tag = 'scoped memory for tpu_custom_call.1']
    #allocation7 [shape = 'u8[2048]{0}', space=vmem, size = 0x800, scoped, tag = 'output window, operand 0, single buffered']
    %8 = vsyncpa [#allocation3], 0
    %9 = vsyncpa [#allocation6], 0
    %10 = vsyncpa [#allocation4], 0
    // Predicated region
    $region2: #{tpu_custom_call.1} parent=1 // pred_check
      _
    $region3: #{tpu_custom_call.1} parent=1 // pred_check_branch
      %12 = sbr.rel (0) target = $region5
    $region4: #{tpu_custom_call.1} parent=1 // pred_region
      %s14 = ssub.s32 64, 64
      %15 = vsyncadd [#allocation3], %s14
      %s17 = sshll.u32 [#allocation2], 4
      %s18 = int_to_ptr.vmem [resolvable:$true] %s17
      %20 = dma.hbm_to_vmem [thread:$0]  %s0, 64, %s18, [#allocation3]
    $region5: #{tpu_custom_call.1} parent=1 // pred_fallthru
      _
    // Predicated region
    $region6: #{tpu_custom_call.1} parent=1 // pred_check
      _
    $region7: #{tpu_custom_call.1} parent=1 // pred_check_branch
      %22 = sbr.rel (0) target = $region9
    $region8: #{tpu_custom_call.1} parent=1 // pred_region
      %s24 = ssub.s32 1024, 1024
      %25 = vsyncadd [#allocation6], %s24
      %s26 = sshll.u32 [#allocation5], 4
      %s27 = int_to_ptr.vmem [resolvable:$true] %s26
      %32 = dma.hbm_to_vmem [thread:$0]  %s1, 1024, %s27, [#allocation6], 64, 64, 4
    $region9: #{tpu_custom_call.1} parent=1 // pred_fallthru
      _
    // Predicated region
    $region10: #{tpu_custom_call.1} parent=1 // pred_check
      _
    $region11: #{tpu_custom_call.1} parent=1 // pred_check_branch
      %34 = sbr.rel (0) target = $region13
    $region12: #{tpu_custom_call.1} parent=1 // pred_region
      _
    $region13: #{tpu_custom_call.1} parent=1 // pred_fallthru
      _
    // Predicated region
    $region14: #{tpu_custom_call.1} parent=1 // pred_check
      _
    $region15: #{tpu_custom_call.1} parent=1 // pred_check_branch
      %36 = sbr.rel (0) target = $region17
    $region16: #{tpu_custom_call.1} parent=1 // pred_region
      %37 = dma.done [#allocation3], 64
    $region17: #{tpu_custom_call.1} parent=1 // pred_fallthru
      _
    // Predicated region
    $region18: #{tpu_custom_call.1} parent=1 // pred_check
      _
    $region19: #{tpu_custom_call.1} parent=1 // pred_check_branch
      %39 = sbr.rel (0) target = $region21
    $region20: #{tpu_custom_call.1} parent=1 // pred_region
      %40 = dma.done [#allocation6], 1024
    $region21: #{tpu_custom_call.1} parent=1 // pred_fallthru
      _
    %v42 = vld [vmem:[#allocation2] sm:$0xf]
    %v43 = vld [vmem:[#allocation5] sm:$0xf]
    %v44 = vld [vmem:[#allocation5 + $0x4] sm:$0xf]
    %v45 = vld [vmem:[#allocation5 + $0x8] sm:$0xf]
    %v46 = vld [vmem:[#allocation5 + $0xc] sm:$0xf]
    %v47 = vld [vmem:[#allocation5 + $0x10] sm:$0xf]
    %v48 = vld [vmem:[#allocation5 + $0x14] sm:$0xf]
    %v49 = vld [vmem:[#allocation5 + $0x18] sm:$0xf]
    %v50 = vld [vmem:[#allocation5 + $0x1c] sm:$0xf]
    %v51 = vld [vmem:[#allocation5 + $0x20] sm:$0xf]
    %v52 = vld [vmem:[#allocation5 + $0x24] sm:$0xf]
    %v53 = vld [vmem:[#allocation5 + $0x28] sm:$0xf]
    %v54 = vld [vmem:[#allocation5 + $0x2c] sm:$0xf]
    %v55 = vld [vmem:[#allocation5 + $0x30] sm:$0xf]
    %v56 = vld [vmem:[#allocation5 + $0x34] sm:$0xf]
    %v57 = vld [vmem:[#allocation5 + $0x38] sm:$0xf]
    %v58 = vld [vmem:[#allocation5 + $0x3c] sm:$0xf]
    %v59 = vpack.c.bf16 %v42, %v42
    %v60 = vunpack.c.l.bf16 %v59
    %v61 = vsub.f32 %v42, %v60
    %v62 = vpack.c.bf16 %v61, %v61
    %v79 = vunpack.c.l.b16 %v43
    %v80 = vunpack.c.l.b16 %v44
    %v81 = vunpack.c.l.b16 %v45
    %v82 = vunpack.c.l.b16 %v46
    %v83 = vunpack.c.l.b16 %v47
    %v84 = vunpack.c.l.b16 %v48
    %v85 = vunpack.c.l.b16 %v49
    %v86 = vunpack.c.l.b16 %v50
    %v87 = vunpack.c.l.b16 %v51
    %v88 = vunpack.c.l.b16 %v52
    %v89 = vunpack.c.l.b16 %v53
    %v90 = vunpack.c.l.b16 %v54
    %v91 = vunpack.c.l.b16 %v55
    %v92 = vunpack.c.l.b16 %v56
    %v93 = vunpack.c.l.b16 %v57
    %v94 = vunpack.c.l.b16 %v58
    %v95 = vpack.c.b16 %v80, %v79
    %v96 = vpack.c.b16 %v82, %v81
    %v97 = vpack.c.b16 %v84, %v83
    %v98 = vpack.c.b16 %v86, %v85
    %v99 = vpack.c.b16 %v88, %v87
    %v100 = vpack.c.b16 %v90, %v89
    %v101 = vpack.c.b16 %v92, %v91
    %v102 = vpack.c.b16 %v94, %v93
    %111 = vmatprep.subr.bf16.mxu0 0
    %112 = vmatpush1.bf16.msra.mxu0 %v95
    %113 = vmatprep.subr.bf16.mxu0 0
    %114 = vmatpush1.bf16.msra.mxu0 %v96
    %115 = vmatprep.subr.bf16.mxu0 0
    %116 = vmatpush1.bf16.msra.mxu0 %v97
    %117 = vmatprep.subr.bf16.mxu0 0
    %118 = vmatpush1.bf16.msra.mxu0 %v98
    %119 = vmatprep.subr.bf16.mxu0 0
    %120 = vmatpush1.bf16.msra.mxu0 %v99
    %121 = vmatprep.subr.bf16.mxu0 0
    %122 = vmatpush1.bf16.msra.mxu0 %v100
    %123 = vmatprep.subr.bf16.mxu0 0
    %124 = vmatpush1.bf16.msra.mxu0 %v101
    %125 = vmatprep.subr.bf16.mxu0 0
    %126 = vmatpush1.bf16.msra.mxu0 %v102
    %127 = vmatprep.subr.bf16.mxu0 0
    %128 = vmatpush1.bf16.msra.mxu0 0
    %129 = vmatprep.subr.bf16.mxu0 0
    %130 = vmatpush1.bf16.msra.mxu0 0
    %131 = vmatprep.subr.bf16.mxu0 0
    %132 = vmatpush1.bf16.msra.mxu0 0
    %133 = vmatprep.subr.bf16.mxu0 0
    %134 = vmatpush1.bf16.msra.mxu0 0
    %135 = vmatprep.subr.bf16.mxu0 0
    %136 = vmatpush1.bf16.msra.mxu0 0
    %137 = vmatprep.subr.bf16.mxu0 0
    %138 = vmatpush1.bf16.msra.mxu0 0
    %139 = vmatprep.subr.bf16.mxu0 0
    %140 = vmatpush1.bf16.msra.mxu0 0
    %141 = vmatprep.subr.bf16.mxu0 0
    %142 = vmatpush1.bf16.msra.mxu0 0
    %143 = vmatprep.mubr.bf16.mxu0 0
    %144 = vmatmul.mubr.bf16.gmra.mrb[0].mxu0 %v62
    %v145 = vpop.f32.mrb[0].mxu0
    %v146 = vadd.f32 0.0, %v145
    %v147 = vpop.f32.mrb[0].mxu0
    %v148 = vpop.f32.mrb[0].mxu0
    %v149 = vpop.f32.mrb[0].mxu0
    %150 = vdwg.mxu0
    %151 = vmatprep.subr.bf16.mxu0 0
    %152 = vmatpush1.bf16.msra.mxu0 %v95
    %153 = vmatprep.subr.bf16.mxu0 0
    %154 = vmatpush1.bf16.msra.mxu0 %v96
    %155 = vmatprep.subr.bf16.mxu0 0
    %156 = vmatpush1.bf16.msra.mxu0 %v97
    %157 = vmatprep.subr.bf16.mxu0 0
    %158 = vmatpush1.bf16.msra.mxu0 %v98
    %159 = vmatprep.subr.bf16.mxu0 0
    %160 = vmatpush1.bf16.msra.mxu0 %v99
    %161 = vmatprep.subr.bf16.mxu0 0
    %162 = vmatpush1.bf16.msra.mxu0 %v100
    %163 = vmatprep.subr.bf16.mxu0 0
    %164 = vmatpush1.bf16.msra.mxu0 %v101
    %165 = vmatprep.subr.bf16.mxu0 0
    %166 = vmatpush1.bf16.msra.mxu0 %v102
    %167 = vmatprep.subr.bf16.mxu0 0
    %168 = vmatpush1.bf16.msra.mxu0 0
    %169 = vmatprep.subr.bf16.mxu0 0
    %170 = vmatpush1.bf16.msra.mxu0 0
    %171 = vmatprep.subr.bf16.mxu0 0
    %172 = vmatpush1.bf16.msra.mxu0 0
    %173 = vmatprep.subr.bf16.mxu0 0
    %174 = vmatpush1.bf16.msra.mxu0 0
    %175 = vmatprep.subr.bf16.mxu0 0
    %176 = vmatpush1.bf16.msra.mxu0 0
    %177 = vmatprep.subr.bf16.mxu0 0
    %178 = vmatpush1.bf16.msra.mxu0 0
    %179 = vmatprep.subr.bf16.mxu0 0
    %180 = vmatpush1.bf16.msra.mxu0 0
    %181 = vmatprep.subr.bf16.mxu0 0
    %182 = vmatpush1.bf16.msra.mxu0 0
    %183 = vmatprep.mubr.bf16.mxu0 0
    %184 = vmatmul.mubr.bf16.gmra.mrb[0].mxu0 %v59
    %v185 = vpop.f32.mrb[0].mxu0
    %v186 = vadd.f32 %v146, %v185
    %v187 = vpop.f32.mrb[0].mxu0
    %v188 = vpop.f32.mrb[0].mxu0
    %v189 = vpop.f32.mrb[0].mxu0
    %190 = vdwg.mxu0
    %v191 = vmul.f32 %v186, 0.03125
    %v192 = vsub.f32 %v42, %v191
    %v193 = vmul.f32 %v192, %v192
    %v194 = vpack.c.bf16 %v193, %v193
    %v195 = vunpack.c.l.bf16 %v194
    %v196 = vsub.f32 %v193, %v195
    %v197 = vpack.c.bf16 %v196, %v196
    %198 = vmatprep.subr.bf16.mxu0 0
    %199 = vmatpush1.bf16.msra.mxu0 %v95
    %200 = vmatprep.subr.bf16.mxu0 0
    %201 = vmatpush1.bf16.msra.mxu0 %v96
    %202 = vmatprep.subr.bf16.mxu0 0
    %203 = vmatpush1.bf16.msra.mxu0 %v97
    %204 = vmatprep.subr.bf16.mxu0 0
    %205 = vmatpush1.bf16.msra.mxu0 %v98
    %206 = vmatprep.subr.bf16.mxu0 0
    %207 = vmatpush1.bf16.msra.mxu0 %v99
    %208 = vmatprep.subr.bf16.mxu0 0
    %209 = vmatpush1.bf16.msra.mxu0 %v100
    %210 = vmatprep.subr.bf16.mxu0 0
    %211 = vmatpush1.bf16.msra.mxu0 %v101
    %212 = vmatprep.subr.bf16.mxu0 0
    %213 = vmatpush1.bf16.msra.mxu0 %v102
    %214 = vmatprep.subr.bf16.mxu0 0
    %215 = vmatpush1.bf16.msra.mxu0 0
    %216 = vmatprep.subr.bf16.mxu0 0
    %217 = vmatpush1.bf16.msra.mxu0 0
    %218 = vmatprep.subr.bf16.mxu0 0
    %219 = vmatpush1.bf16.msra.mxu0 0
    %220 = vmatprep.subr.bf16.mxu0 0
    %221 = vmatpush1.bf16.msra.mxu0 0
    %222 = vmatprep.subr.bf16.mxu0 0
    %223 = vmatpush1.bf16.msra.mxu0 0
    %224 = vmatprep.subr.bf16.mxu0 0
    %225 = vmatpush1.bf16.msra.mxu0 0
    %226 = vmatprep.subr.bf16.mxu0 0
    %227 = vmatpush1.bf16.msra.mxu0 0
    %228 = vmatprep.subr.bf16.mxu0 0
    %229 = vmatpush1.bf16.msra.mxu0 0
    %230 = vmatprep.mubr.bf16.mxu0 0
    %231 = vmatmul.mubr.bf16.gmra.mrb[0].mxu0 %v197
    %v232 = vpop.f32.mrb[0].mxu0
    %v233 = vadd.f32 0.0, %v232
    %v234 = vpop.f32.mrb[0].mxu0
    %v235 = vpop.f32.mrb[0].mxu0
    %v236 = vpop.f32.mrb[0].mxu0
    %237 = vdwg.mxu0
    %238 = vmatprep.subr.bf16.mxu0 0
    %239 = vmatpush1.bf16.msra.mxu0 %v95
    %240 = vmatprep.subr.bf16.mxu0 0
    %241 = vmatpush1.bf16.msra.mxu0 %v96
    %242 = vmatprep.subr.bf16.mxu0 0
    %243 = vmatpush1.bf16.msra.mxu0 %v97
    %244 = vmatprep.subr.bf16.mxu0 0
    %245 = vmatpush1.bf16.msra.mxu0 %v98
    %246 = vmatprep.subr.bf16.mxu0 0
    %247 = vmatpush1.bf16.msra.mxu0 %v99
    %248 = vmatprep.subr.bf16.mxu0 0
    %249 = vmatpush1.bf16.msra.mxu0 %v100
    %250 = vmatprep.subr.bf16.mxu0 0
    %251 = vmatpush1.bf16.msra.mxu0 %v101
    %252 = vmatprep.subr.bf16.mxu0 0
    %253 = vmatpush1.bf16.msra.mxu0 %v102
    %254 = vmatprep.subr.bf16.mxu0 0
    %255 = vmatpush1.bf16.msra.mxu0 0
    %256 = vmatprep.subr.bf16.mxu0 0
    %257 = vmatpush1.bf16.msra.mxu0 0
    %258 = vmatprep.subr.bf16.mxu0 0
    %259 = vmatpush1.bf16.msra.mxu0 0
    %260 = vmatprep.subr.bf16.mxu0 0
    %261 = vmatpush1.bf16.msra.mxu0 0
    %262 = vmatprep.subr.bf16.mxu0 0
    %263 = vmatpush1.bf16.msra.mxu0 0
    %264 = vmatprep.subr.bf16.mxu0 0
    %265 = vmatpush1.bf16.msra.mxu0 0
    %266 = vmatprep.subr.bf16.mxu0 0
    %267 = vmatpush1.bf16.msra.mxu0 0
    %268 = vmatprep.subr.bf16.mxu0 0
    %269 = vmatpush1.bf16.msra.mxu0 0
    %270 = vmatprep.mubr.bf16.mxu0 0
    %271 = vmatmul.mubr.bf16.gmra.mrb[0].mxu0 %v194
    %v272 = vpop.f32.mrb[0].mxu0
    %v273 = vadd.f32 %v233, %v272
    %v274 = vpop.f32.mrb[0].mxu0
    %v275 = vpop.f32.mrb[0].mxu0
    %v276 = vpop.f32.mrb[0].mxu0
    %277 = vdwg.mxu0
    %v278 = vmul.f32 %v273, 0.03125
    %v279 = vadd.f32 %v278, 1e-05
    %v280 = vrsqrt.pop %v279
    %v281 = vmul.f32 %v192, %v280
    %v282 = vld [vmem:[%s2] sm:$0x1]
    %v284 = vlaneseq
    %v285 = vshrl.u32 %v284, 7
    %v286 = vsub.s32 0, %v285
    %v287 = vrot.slane %v282, %v286
    %v289 = vmul.f32 %v281, %v287
    %290 = vst [vmem:[#allocation7] sm:$0xf] %v289
    // Predicated region
    $region22: #{tpu_custom_call.1} parent=1 // pred_check
      _
    $region23: #{tpu_custom_call.1} parent=1 // pred_check_branch
      %292 = sbr.rel (0) target = $region25
    $region24: #{tpu_custom_call.1} parent=1 // pred_region
      %s294 = ssub.s32 64, 64
      %295 = vsyncadd [#allocation4], %s294
      %s297 = sshll.u32 [#allocation7], 4
      %s298 = int_to_ptr.vmem [resolvable:$true] %s297
      %300 = dma.vmem_to_hbm [thread:$0]  %s298, 64, %s3, [#allocation4]
    $region25: #{tpu_custom_call.1} parent=1 // pred_fallthru
      _
    // Predicated region
    $region26: #{tpu_custom_call.1} parent=1 // pred_check
      _
    $region27: #{tpu_custom_call.1} parent=1 // pred_check_branch
      %302 = sbr.rel (0) target = $region29
    $region28: #{tpu_custom_call.1} parent=1 // pred_region
      %303 = dma.done [#allocation4], 64
    $region29: #{tpu_custom_call.1} parent=1 // pred_fallthru
      _
    %304 = vsyncpa [#allocation3], 1
    %305 = vsyncpa [#allocation6], 1
    %306 = vsyncpa [#allocation4], 1

</llo_original>
